<compile_context>
chip_gen: v6e
topology: v6e:2x2x1
jax: 0.10.0
libtpu: 0.0.40
codegen_flags: <defaults>
</compile_context>

<pallas_src>
import functools

import numpy as np
import jax
import jax.numpy as jnp
from jax.experimental import pallas as pl
from jax.experimental.pallas import tpu as pltpu

# ---- module hyper-parameters (Cnn.__init__) ----
INPUT_DIM = 4          # input_dim  (embedding dim)
HIDDEN_DIM = 32        # hidden_dim (unused for num_layers <= 1)
NUM_LAYERS = 1         # num_layers <= 1  -> Conv1d(input_dim, output_dim, window_size)
OUTPUT_DIM = 32        # output_dim
WINDOW = 3             # window_size
# TODO(synk): the num_layers > 1 branch requires the external `MLP` class, which is
# not defined in the reference source; only the Conv1d (num_layers <= 1) path is done.


# ------------------------------------------------------------------ kernel ----
def _make_cnn_kernel(rows, window, vocab, cout):
    """Fused embedding-gather + Conv1d as ONE matmul (single block, no grid)."""
    wv = window * vocab           # width of the one-hot patch (without bias column)
    wv1 = wv + 1                  # + constant-1 bias column

    def kernel(pidx_ref, w_ref, o_ref):
        # pidx_ref: (rows, W)   int32, token id for window offset k at row t*B + b
        # w_ref:    (W*vocab+1, Cout) f32, fused emb (X) conv weight; last row = bias
        # o_ref:    (rows, Cout) f32, row index = t*B + b
        pidx = pidx_ref[...]                                            # (rows, W)
        iota = jax.lax.broadcasted_iota(jnp.int32, (rows, wv1), 1)      # (rows, wv1)
        # Bias column: column `wv` is always 1.
        patches = (iota == wv).astype(jnp.float32)
        # One compare per window offset builds the disjoint one-hot blocks.
        # NOTE: out-of-range token ids would yield an all-zero block (zero embedding)
        # instead of torch.nn.Embedding's index error.
        for k in range(window):
            patches = patches + (
                iota == (pidx[:, k:k + 1] + k * vocab)
            ).astype(jnp.float32)
        # Single MXU matmul: gather + conv + bias all at once.
        o_ref[...] = jnp.dot(
            patches, w_ref[...], preferred_element_type=jnp.float32
        ).astype(o_ref.dtype)

    return kernel


# -------------------------------------------------- init-time (constant) prep ----
def fuse_embedding_into_conv(embeddings_matrix, conv_weight, conv_bias):
    """W_eff[k*vocab + v, o] = sum_c emb[c, v] * W[o, c, k]; last row is the bias.

    Computed ONCE at module init (constant w.r.t. docs).
    """
    cout = conv_weight.shape[0]
    w_kvo = jnp.einsum(
        "cv,ock->kvo",
        embeddings_matrix.astype(jnp.float32),
        conv_weight.astype(jnp.float32),
    )                                                                    # (W, vocab, Cout)
    w_eff = jnp.concatenate(
        [w_kvo.reshape(-1, cout), conv_bias.reshape(1, cout).astype(jnp.float32)],
        axis=0,
    )                                                                    # (W*vocab+1, Cout)
    return w_eff


def make_patch_gather_index(batch, max_doc_len, window):
    """gather[t*B + b, k] = b*L + (t + k): flat index into docs.reshape(-1). Constant."""
    nw = max_doc_len - window + 1
    t = np.arange(nw).reshape(nw, 1, 1)
    b = np.arange(batch).reshape(1, batch, 1)
    k = np.arange(window).reshape(1, 1, window)
    return jnp.asarray((b * max_doc_len + t + k).reshape(nw * batch, window), jnp.int32)


def build_cnn_conv(embeddings_matrix, conv_weight, conv_bias, batch, max_doc_len):
    """Build the per-call forward: docs (B, L) int32 -> (NW, B, Cout) f32."""
    cin, vocab = embeddings_matrix.shape
    cout = conv_weight.shape[0]
    nw = max_doc_len - WINDOW + 1
    rows = nw * batch

    # Constant (per-model / per-shape) prep -- hoisted out of the per-call path.
    w_eff = fuse_embedding_into_conv(embeddings_matrix, conv_weight, conv_bias)
    gather_idx = make_patch_gather_index(batch, max_doc_len, WINDOW)

    kernel = _make_cnn_kernel(rows, WINDOW, vocab, cout)
    call = pl.pallas_call(
        kernel,
        out_shape=jax.ShapeDtypeStruct((rows, cout), jnp.float32),
        in_specs=[pl.BlockSpec(memory_space=pltpu.MemorySpace.VMEM)] * 2,
        out_specs=pl.BlockSpec(memory_space=pltpu.MemorySpace.VMEM),
    )

    @jax.jit
    def forward(docs):
        # Per-call: one tiny gather (docs -> patch token ids) + one kernel.
        pidx = jnp.take(docs.reshape(-1).astype(jnp.int32), gather_idx, axis=0)
        out = call(pidx, w_eff)                                          # (NW*B, Cout)
        # Rows are already ordered t*B + b -> reshape is free metadata, equals
        # conv1d(x).permute(2, 0, 1) of the reference.
        return out.reshape(nw, batch, cout)

    return forward


# ------------------------------------------------------------- module forward ----
def cnn_forward(forward_fn, docs, doc_lens):
    """Replicates Cnn.forward for num_layers <= 1 (returns unpacked result + lengths)."""
    _, max_doc_len = docs.shape
    assert max_doc_len >= WINDOW, "max doc length smaller than window size"
    doc_lens = [max(WINDOW, int(l)) for l in doc_lens]

    result = forward_fn(docs)                                            # (NW, B, Cout)
    lengths = [max(0, l - WINDOW + 1) for l in doc_lens]
    return result, lengths


def pack_padded(result_np, lengths):
    """Host-side equivalent of torch pack_padded_sequence (enforce_sorted=True)."""
    lengths = np.asarray(lengths)
    max_len = int(lengths.max())
    batch_sizes = np.array([int((lengths > t).sum()) for t in range(max_len)], np.int64)
    data = np.concatenate(
        [result_np[t, : batch_sizes[t], :] for t in range(max_len)], axis=0
    )
    return data, batch_sizes


if __name__ == "__main__":
    key = jax.random.PRNGKey(0)
    k_emb, k_doc, k_w, k_b = jax.random.split(key, 4)

    B = 2
    MAX_DOC_LEN = 16
    VOCAB = 20

    embeddings_matrix = jax.random.normal(k_emb, (INPUT_DIM, VOCAB), jnp.float32)
    docs = jax.random.randint(k_doc, (B, MAX_DOC_LEN), 0, VOCAB, jnp.int32)
    doc_lens = [16, 12]  # sorted descending, as required by pack_padded_sequence

    # Deterministic Conv1d parameter init (PyTorch-style uniform bound).
    fan_in = INPUT_DIM * WINDOW
    bound = 1.0 / np.sqrt(fan_in)
    conv_weight = jax.random.uniform(
        k_w, (OUTPUT_DIM, INPUT_DIM, WINDOW), jnp.float32, -bound, bound
    )
    conv_bias = jax.random.uniform(k_b, (OUTPUT_DIM,), jnp.float32, -bound, bound)

    # Module init: fuse params / build the per-call forward once.
    forward_fn = build_cnn_conv(embeddings_matrix, conv_weight, conv_bias, B, MAX_DOC_LEN)

    result, lengths = cnn_forward(forward_fn, docs, doc_lens)
    result = jax.block_until_ready(result)

    # Numpy reference check of the fused gather + conv hot path.
    x_ncl = np.transpose(np.asarray(embeddings_matrix)[:, np.asarray(docs)], (1, 0, 2))
    w_np = np.asarray(conv_weight)
    nw = MAX_DOC_LEN - WINDOW + 1
    ref = np.zeros((B, OUTPUT_DIM, nw), np.float32)
    for t in range(nw):
        patch = x_ncl[:, :, t : t + WINDOW].reshape(B, -1)           # (B, Cin*W)
        ref[:, :, t] = patch @ w_np.reshape(OUTPUT_DIM, -1).T + np.asarray(conv_bias)
    ref_result = np.transpose(ref, (2, 0, 1))                         # (NW, B, Cout)
    np.testing.assert_allclose(np.asarray(result), ref_result, rtol=1e-5, atol=1e-5)

    packed_data, batch_sizes = pack_padded(np.asarray(result), lengths)
    assert packed_data.shape == (sum(lengths), OUTPUT_DIM)

    print("KERNEL_OK")
</pallas_src>

<mosaic_0001>
module attributes {stable_mosaic.version = 11 : i64} {
  func.func @kernel(%arg0: memref<28x3xi32, #tpu.memory_space<vmem>>, %arg1: memref<61x32xf32, #tpu.memory_space<vmem>>, %arg2: memref<28x32xf32, #tpu.memory_space<vmem>>) attributes {dimension_semantics = [], scalar_prefetch = 0 : i64, scratch_operands = 0 : i64, tpu.core_type = #tpu.core_type<tc>} {
    %c0 = arith.constant 0 : index
    %c0_0 = arith.constant 0 : index
    %0 = vector.load %arg0[%c0, %c0_0] : memref<28x3xi32, #tpu.memory_space<vmem>>, vector<28x3xi32>
    %1 = tpu.iota {dimensions = array<i32: 1>} : vector<28x61xi32>
    %c60_i32 = arith.constant 60 : i32
    %2 = vector.broadcast %c60_i32 : i32 to vector<28x61xi32>
    %3 = arith.cmpi eq, %1, %2 : vector<28x61xi32>
    %4 = arith.extui %3 : vector<28x61xi1> to vector<28x61xi32>
    %5 = arith.sitofp %4 : vector<28x61xi32> to vector<28x61xf32>
    %6 = vector.extract_strided_slice %0 {offsets = [0, 0], sizes = [28, 1], strides = [1, 1]} : vector<28x3xi32> to vector<28x1xi32>
    %c0_i32 = arith.constant 0 : i32
    %7 = vector.broadcast %c0_i32 : i32 to vector<28x1xi32>
    %8 = arith.addi %6, %7 : vector<28x1xi32>
    %9 = vector.broadcast %8 : vector<28x1xi32> to vector<28x61xi32>
    %10 = arith.cmpi eq, %1, %9 : vector<28x61xi32>
    %11 = arith.extui %10 : vector<28x61xi1> to vector<28x61xi32>
    %12 = arith.sitofp %11 : vector<28x61xi32> to vector<28x61xf32>
    %13 = arith.addf %5, %12 : vector<28x61xf32>
    %14 = vector.extract_strided_slice %0 {offsets = [0, 1], sizes = [28, 1], strides = [1, 1]} : vector<28x3xi32> to vector<28x1xi32>
    %c20_i32 = arith.constant 20 : i32
    %15 = vector.broadcast %c20_i32 : i32 to vector<28x1xi32>
    %16 = arith.addi %14, %15 : vector<28x1xi32>
    %17 = vector.broadcast %16 : vector<28x1xi32> to vector<28x61xi32>
    %18 = arith.cmpi eq, %1, %17 : vector<28x61xi32>
    %19 = arith.extui %18 : vector<28x61xi1> to vector<28x61xi32>
    %20 = arith.sitofp %19 : vector<28x61xi32> to vector<28x61xf32>
    %21 = arith.addf %13, %20 : vector<28x61xf32>
    %22 = vector.extract_strided_slice %0 {offsets = [0, 2], sizes = [28, 1], strides = [1, 1]} : vector<28x3xi32> to vector<28x1xi32>
    %c40_i32 = arith.constant 40 : i32
    %23 = vector.broadcast %c40_i32 : i32 to vector<28x1xi32>
    %24 = arith.addi %22, %23 : vector<28x1xi32>
    %25 = vector.broadcast %24 : vector<28x1xi32> to vector<28x61xi32>
    %26 = arith.cmpi eq, %1, %25 : vector<28x61xi32>
    %27 = arith.extui %26 : vector<28x61xi1> to vector<28x61xi32>
    %28 = arith.sitofp %27 : vector<28x61xi32> to vector<28x61xf32>
    %29 = arith.addf %21, %28 : vector<28x61xf32>
    %c0_1 = arith.constant 0 : index
    %c0_2 = arith.constant 0 : index
    %30 = vector.load %arg1[%c0_1, %c0_2] : memref<61x32xf32, #tpu.memory_space<vmem>>, vector<61x32xf32>
    %cst = arith.constant dense<0.000000e+00> : vector<28x32xf32>
    %31 = tpu.matmul %29, %30, %cst {dimension_numbers = #tpu.dot_dimension_numbers<[1], [0], [0], [1], [0, 0, 1, 1], [], []>} : vector<28x61xf32>, vector<61x32xf32>, vector<28x32xf32> -> vector<28x32xf32>
    %c0_3 = arith.constant 0 : index
    %c0_4 = arith.constant 0 : index
    %32 = vector.load %arg2[%c0_3, %c0_4] : memref<28x32xf32, #tpu.memory_space<vmem>>, vector<28x32xf32>
    tpu.vector_store %arg2[%c0_3, %c0_4], %31 {strides = array<i32>} : memref<28x32xf32, #tpu.memory_space<vmem>>, vector<28x32xf32>,
    return
  }
}

</mosaic_0001>

<llo_original>
// kernel: forward.1
$region0: #{forward.1}
  #allocation0 [shape = 'u32[]', space=smem, size = 0x4, offset = 0x4, fixed_abs, tag = 'smem constant byte address 0x4 - core index']
  #allocation1 [shape = 'u32[144,128]{1,0:T(1,128)}', space=vmem, size = 0x12000, scoped, tag = 'internal scratch']
  %s0 = inlined_call_operand.vmem [shape: s32[28,3], index: 0, kind: input, shape index: {}]
  %s1 = inlined_call_operand.vmem [shape: f32[61,32], index: 1, kind: input, shape index: {}]
  %s2 = inlined_call_operand.vmem [shape: f32[28,32], index: 2, kind: output, shape index: {}]
  %s3 = sld [smem:[#allocation0]]
  $region18: #{forward.1} parent=0
    _
  %s5 = ssub.s32 1, %s3
  %s6 = scalar_select 0, %s5, %s3
  // Predicated region
  $region2: #{forward.1} parent=0 // pred_check
    _
  $region3: #{forward.1} parent=0 // pred_check_branch
    %8 = sbr.rel (0) target = $region5
  $region4: #{forward.1} parent=0 // pred_region
    _
  $region5: #{forward.1} parent=0 // pred_fallthru
    _
  // Predicated region
  $region6: #{forward.1} parent=0 // pred_check
    _
  $region7: #{forward.1} parent=0 // pred_check_branch
    %10 = sbr.rel (0) target = $region9
  $region8: #{forward.1} parent=0 // pred_region
    _
  $region9: #{forward.1} parent=0 // pred_fallthru
    _
  %v11 = vld [vmem:[%s0] sm:$0xff]
  %v12 = vld [vmem:[%s0 + $0x8] sm:$0xff]
  %v13 = vld [vmem:[%s0 + $0x10] sm:$0xff]
  %v14 = vld [vmem:[%s0 + $0x18] sm:$0xf]
  %v15 = vlaneseq
  %v16 = vand.u32 %v15, 127
  %vm17 = vcmp.eq.s32.totalorder %v16, 60
  %v18 = vsel %vm17, 1, 0
  %v19 = vcvt.s32.f32 %v18
  %20 = vset.pattern.permute.xlu0 0
  %21 = vperm.xlu0 %20, %v11
  %v22 = vpop.permute.xlu0 %21
  %23 = vset.pattern.permute.xlu0 0
  %24 = vperm.xlu0 %23, %v12
  %v25 = vpop.permute.xlu0 %24
  %26 = vset.pattern.permute.xlu0 0
  %27 = vperm.xlu0 %26, %v13
  %v28 = vpop.permute.xlu0 %27
  %29 = vset.pattern.permute.xlu0 0
  %30 = vperm.xlu0 %29, %v14
  %v31 = vpop.permute.xlu0 %30
  %vm32 = vcmp.eq.s32.totalorder %v16, %v22
  %vm33 = vcmp.eq.s32.totalorder %v16, %v25
  %vm34 = vcmp.eq.s32.totalorder %v16, %v28
  %vm35 = vcmp.eq.s32.totalorder %v16, %v31
  %v36 = vsel %vm32, 1, 0
  %v37 = vsel %vm33, 1, 0
  %v38 = vsel %vm34, 1, 0
  %v39 = vsel %vm35, 1, 0
  %v40 = vcvt.s32.f32 %v36
  %v41 = vcvt.s32.f32 %v37
  %v42 = vcvt.s32.f32 %v38
  %v43 = vcvt.s32.f32 %v39
  %v44 = vadd.f32 %v19, %v40
  %v45 = vadd.f32 %v19, %v41
  %v46 = vadd.f32 %v19, %v42
  %v47 = vadd.f32 %v19, %v43
  %v48 = vadd.s32 %v11, 20
  %v49 = vadd.s32 %v12, 20
  %v50 = vadd.s32 %v13, 20
  %v51 = vadd.s32 %v14, 20
  %52 = vset.pattern.permute.xlu0 1
  %53 = vperm.xlu0 %52, %v48
  %v54 = vpop.permute.xlu0 %53
  %55 = vset.pattern.permute.xlu0 1
  %56 = vperm.xlu0 %55, %v49
  %v57 = vpop.permute.xlu0 %56
  %58 = vset.pattern.permute.xlu0 1
  %59 = vperm.xlu0 %58, %v50
  %v60 = vpop.permute.xlu0 %59
  %61 = vset.pattern.permute.xlu0 1
  %62 = vperm.xlu0 %61, %v51
  %v63 = vpop.permute.xlu0 %62
  %vm64 = vcmp.eq.s32.totalorder %v16, %v54
  %vm65 = vcmp.eq.s32.totalorder %v16, %v57
  %vm66 = vcmp.eq.s32.totalorder %v16, %v60
  %vm67 = vcmp.eq.s32.totalorder %v16, %v63
  %v68 = vsel %vm64, 1, 0
  %v69 = vsel %vm65, 1, 0
  %v70 = vsel %vm66, 1, 0
  %v71 = vsel %vm67, 1, 0
  %v72 = vcvt.s32.f32 %v68
  %v73 = vcvt.s32.f32 %v69
  %v74 = vcvt.s32.f32 %v70
  %v75 = vcvt.s32.f32 %v71
  %v76 = vadd.f32 %v44, %v72
  %v77 = vadd.f32 %v45, %v73
  %v78 = vadd.f32 %v46, %v74
  %v79 = vadd.f32 %v47, %v75
  %v80 = vadd.s32 %v11, 40
  %v81 = vadd.s32 %v12, 40
  %v82 = vadd.s32 %v13, 40
  %v83 = vadd.s32 %v14, 40
  %84 = vset.pattern.permute.xlu0 2
  %85 = vperm.xlu0 %84, %v80
  %v86 = vpop.permute.xlu0 %85
  %87 = vset.pattern.permute.xlu0 2
  %88 = vperm.xlu0 %87, %v81
  %v89 = vpop.permute.xlu0 %88
  %90 = vset.pattern.permute.xlu0 2
  %91 = vperm.xlu0 %90, %v82
  %v92 = vpop.permute.xlu0 %91
  %93 = vset.pattern.permute.xlu0 2
  %94 = vperm.xlu0 %93, %v83
  %v95 = vpop.permute.xlu0 %94
  %vm96 = vcmp.eq.s32.totalorder %v16, %v86
  %vm97 = vcmp.eq.s32.totalorder %v16, %v89
  %vm98 = vcmp.eq.s32.totalorder %v16, %v92
  %vm99 = vcmp.eq.s32.totalorder %v16, %v95
  %v100 = vsel %vm96, 1, 0
  %v101 = vsel %vm97, 1, 0
  %v102 = vsel %vm98, 1, 0
  %v103 = vsel %vm99, 1, 0
  %v104 = vcvt.s32.f32 %v100
  %v105 = vcvt.s32.f32 %v101
  %v106 = vcvt.s32.f32 %v102
  %v107 = vcvt.s32.f32 %v103
  %v108 = vadd.f32 %v76, %v104
  %v109 = vadd.f32 %v77, %v105
  %v110 = vadd.f32 %v78, %v106
  %v111 = vadd.f32 %v79, %v107
  %v112 = vld [vmem:[%s1] sm:$0xff]
  %v113 = vld [vmem:[%s1 + $0x8] sm:$0xff]
  %v114 = vld [vmem:[%s1 + $0x10] sm:$0xff]
  %v115 = vld [vmem:[%s1 + $0x18] sm:$0xff]
  %v116 = vld [vmem:[%s1 + $0x20] sm:$0xff]
  %v117 = vld [vmem:[%s1 + $0x28] sm:$0xff]
  %v118 = vld [vmem:[%s1 + $0x30] sm:$0xff]
  %v119 = vld [vmem:[%s1 + $0x38] sm:$0x1f]
  %vm120 = vcmask 498688
  %v122 = vsel %vm120, %v108, 0
  %v125 = vsel %vm120, %v109, 0
  %v128 = vsel %vm120, %v110, 0
  %v131 = vsel %vm120, %v111, 0
  %vm133 = vcmask 1044480
  %v135 = vsel %vm133, %v119, 0
  %137 = vmatprep.subr.mxu0 0.0
  %138 = vmatpush1.msra.mxu0 0.0
  %139 = vmatprep.subr.mxu0 0.0
  %140 = vmatpush1.msra.mxu0 0.0
  %141 = vmatprep.subr.mxu0 0.0
  %142 = vmatpush1.msra.mxu0 0.0
  %143 = vmatprep.subr.mxu0 0.0
  %144 = vmatpush1.msra.mxu0 0.0
  %145 = vmatprep.subr.mxu0 0.0
  %146 = vmatpush1.msra.mxu0 0.0
  %147 = vmatprep.subr.mxu0 0.0
  %148 = vmatpush1.msra.mxu0 0.0
  %149 = vmatprep.subr.mxu0 0.0
  %150 = vmatpush1.msra.mxu0 0.0
  %151 = vmatprep.subr.mxu0 0.0
  %152 = vmatpush1.msra.mxu0 0.0
  %153 = vmatprep.subr.mxu0 0.0
  %154 = vmatpush1.msra.mxu0 %v135
  %155 = vmatprep.subr.mxu0 0.0
  %156 = vmatpush1.msra.mxu0 %v118
  %157 = vmatprep.subr.mxu0 0.0
  %158 = vmatpush1.msra.mxu0 %v117
  %159 = vmatprep.subr.mxu0 0.0
  %160 = vmatpush1.msra.mxu0 %v116
  %161 = vmatprep.subr.mxu0 0.0
  %162 = vmatpush1.msra.mxu0 %v115
  %163 = vmatprep.subr.mxu0 0.0
  %164 = vmatpush1.msra.mxu0 %v114
  %165 = vmatprep.subr.mxu0 0.0
  %166 = vmatpush1.msra.mxu0 %v113
  %167 = vmatprep.subr.mxu0 0.0
  %168 = vmatpush1.msra.mxu0 %v112
  %169 = vmatprep.subr.mxu0 0.0
  %170 = vmatpush2.msra.mxu0 0.0
  %171 = vmatprep.subr.mxu0 0.0
  %172 = vmatpush2.msra.mxu0 0.0
  %173 = vmatprep.subr.mxu0 0.0
  %174 = vmatpush2.msra.mxu0 0.0
  %175 = vmatprep.subr.mxu0 0.0
  %176 = vmatpush2.msra.mxu0 0.0
  %177 = vmatprep.subr.mxu0 0.0
  %178 = vmatpush2.msra.mxu0 0.0
  %179 = vmatprep.subr.mxu0 0.0
  %180 = vmatpush2.msra.mxu0 0.0
  %181 = vmatprep.subr.mxu0 0.0
  %182 = vmatpush2.msra.mxu0 0.0
  %183 = vmatprep.subr.mxu0 0.0
  %184 = vmatpush2.msra.mxu0 0.0
  %185 = vmatprep.subr.mxu0 0.0
  %186 = vmatpush2.msra.mxu0 0.0
  %187 = vmatprep.subr.mxu0 0.0
  %188 = vmatpush2.msra.mxu0 0.0
  %189 = vmatprep.subr.mxu0 0.0
  %190 = vmatpush2.msra.mxu0 0.0
  %191 = vmatprep.subr.mxu0 0.0
  %192 = vmatpush2.msra.mxu0 0.0
  %193 = vmatprep.subr.mxu0 0.0
  %194 = vmatpush2.msra.mxu0 0.0
  %195 = vmatprep.subr.mxu0 0.0
  %196 = vmatpush2.msra.mxu0 0.0
  %197 = vmatprep.subr.mxu0 0.0
  %198 = vmatpush2.msra.mxu0 0.0
  %199 = vmatprep.subr.mxu0 0.0
  %200 = vmatpush2.msra.mxu0 0.0
  %201 = vmatprep.mubr.f32.mxu0 0.0
  %202 = vmatmul.mubr.f32.gmra.mxu0 %v122
  %v203 = vpop.f32.mrf.mxu0
  %v204 = vadd.f32 0.0, %v203
  %v205 = vpop.f32.mrf.mxu0
  %206 = vmatprep.mubr.f32.mxu0 0.0
  %207 = vmatmul.mubr.f32.gmra.mxu0 %v125
  %v208 = vpop.f32.mrf.mxu0
  %v209 = vadd.f32 0.0, %v208
  %v210 = vpop.f32.mrf.mxu0
  %211 = vmatprep.mubr.f32.mxu0 0.0
  %212 = vmatmul.mubr.f32.gmra.mxu0 %v128
  %v213 = vpop.f32.mrf.mxu0
  %v214 = vadd.f32 0.0, %v213
  %v215 = vpop.f32.mrf.mxu0
  %216 = vmatprep.mubr.f32.mxu0 0.0
  %217 = vmatmul.mubr.f32.gmra.mxu0 %v131
  %v218 = vpop.f32.mrf.mxu0
  %v219 = vadd.f32 0.0, %v218
  %v220 = vpop.f32.mrf.mxu0
  %221 = vdwg.mxu0
  %vm222 = vcmask 261120
  %223 = vst.msk [vmem:[%s2] sm:$0xff] %vm222, %v204
  %224 = vst.msk [vmem:[%s2 + $0x8] sm:$0xff] %vm222, %v209
  %225 = vst.msk [vmem:[%s2 + $0x10] sm:$0xff] %vm222, %v214
  %vm226 = vcmask 257024
  %227 = vst.msk [vmem:[%s2 + $0x18] sm:$0xf] %vm226, %v219
  // Predicated region
  $region10: #{forward.1} parent=0 // pred_check
    _
  $region11: #{forward.1} parent=0 // pred_check_branch
    %229 = sbr.rel (0) target = $region13
  $region12: #{forward.1} parent=0 // pred_region
    _
  $region13: #{forward.1} parent=0 // pred_fallthru
    _
  // Predicated region
  $region14: #{forward.1} parent=0 // pred_check
    _
  $region15: #{forward.1} parent=0 // pred_check_branch
    %231 = sbr.rel (0) target = $region17
  $region16: #{forward.1} parent=0 // pred_region
    _
  $region17: #{forward.1} parent=0 // pred_fallthru
    _

</llo_original>
